<compile_context>
chip_gen: v6e
topology: v6e:2x2x1
jax: 0.10.0
libtpu: 0.0.40
codegen_flags: <defaults>
</compile_context>

<pallas_src>
import functools

import jax
import jax.numpy as jnp
from jax import lax
from jax.experimental import pallas as pl
from jax.experimental.pallas import tpu as pltpu


def _round_up(x, m):
    return (x + m - 1) // m * m


# --------------------------------------------------------------------------
# Pallas kernel: 4-tap (2x2) accumulated matmul + folded-BN bias add
# --------------------------------------------------------------------------
def _conv_bn_kernel(zf_ref, w_ref, b_ref, o_ref, acc_ref, *, wz, m_rows):
    """One (image, row-tile) per grid step.

    zf_ref : (Rt, 4*Cin)      flattened s2d rows of this tile (incl. halo row)
    w_ref  : (4, 4*Cin, Cp)   per-tap weights, BN scale pre-folded (bf16)
    b_ref  : (1, Cp)          folded conv-bias + BN shift (f32)
    o_ref  : (m_rows, Cp)     bf16 output rows (junk cols dropped outside)
    acc_ref: (m_rows, Cp)     f32 scratch accumulator
    """
    # Tap (a, b) of the 2x2 stride-1 conv over the s2d grid reads flattened
    # rows starting at a*Wz + b.
    acc_ref[...] = jnp.dot(zf_ref[0:m_rows, :], w_ref[0],
                           preferred_element_type=jnp.float32)
    acc_ref[...] += jnp.dot(zf_ref[1:1 + m_rows, :], w_ref[1],
                            preferred_element_type=jnp.float32)
    acc_ref[...] += jnp.dot(zf_ref[wz:wz + m_rows, :], w_ref[2],
                            preferred_element_type=jnp.float32)
    acc_ref[...] += jnp.dot(zf_ref[wz + 1:wz + 1 + m_rows, :], w_ref[3],
                            preferred_element_type=jnp.float32)
    o_ref[...] = (acc_ref[...] + b_ref[...]).astype(o_ref.dtype)


# --------------------------------------------------------------------------
# MiddleEmbedding forward (NCHW interface, like the PyTorch module)
# --------------------------------------------------------------------------
def middle_embedding_forward(x_nchw, params, *, kernel_size=3, stride=2,
                             eps=1e-5, compute_dtype=jnp.bfloat16,
                             tile_rows=None):
    assert kernel_size == 3 and stride == 2, "kernel specialised for k=3, s=2"
    w = params["w"]                      # (3, 3, Cin, Cout)  (HWIO)
    cb = params["b"]                     # (Cout,)
    gamma, beta = params["gamma"], params["beta"]
    rmean, rvar = params["running_mean"], params["running_var"]

    N, Cin, H, W = x_nchw.shape
    kh, kw, _, Cout = w.shape
    pad = kh // 2
    Ho = (H + 2 * pad - kh) // stride + 1
    Wo = (W + 2 * pad - kw) // stride + 1
    Wz = Wo + 1                          # s2d column cells (1 halo col -> junk)
    K4 = 4 * Cin                         # contraction dim per tap
    Coutp = _round_up(Cout, 128)         # lane-dense output / MXU columns

    # ---- row tile so the double-buffered working set stays small (~<=8 MiB) ----
    if tile_rows is None:
        per_row = Wz * (4 * K4 + 8 * Coutp)          # ~bytes / output s2d row
        tile_rows = min(Ho, max(1, (6 << 20) // max(per_row, 1)))
    tp = int(tile_rows)
    T = -(-Ho // tp)                                 # number of row tiles
    Hz2 = T * tp + 1                                 # s2d row cells incl. halo
    Mt = _round_up(tp * Wz, 8)                       # output rows per tile
    Rt = _round_up(Wz + 1 + Mt, 8)                   # input rows per tile

    # ---- glue: cast bf16 FIRST, pad in NCHW, ONE transpose to s2d layout ----
    x = x_nchw.astype(compute_dtype)
    xp = jnp.pad(x, ((0, 0), (0, 0),
                     (pad, 2 * Hz2 - H - pad),
                     (pad, 2 * Wz - W - pad)))
    z = xp.reshape(N, Cin, Hz2, 2, Wz, 2)
    z = z.transpose(0, 2, 4, 3, 5, 1).reshape(N, Hz2, Wz, K4)

    if T == 1:
        zt = z.reshape(N, 1, Hz2 * Wz, K4)
    else:
        # duplicate the 1-row halo per tile so row tiles need no overlap in-kernel
        idx = jnp.arange(T)[:, None] * tp + jnp.arange(tp + 1)[None, :]
        zt = jnp.take(z, idx, axis=1).reshape(N, T, (tp + 1) * Wz, K4)
    zt = jnp.pad(zt, ((0, 0), (0, 0), (0, Rt - zt.shape[2]), (0, 0)))
    zt = zt.reshape(N * T, Rt, K4)

    # ---- fold conv bias + eval BN; fold BN scale into weights (in f32) ----
    inv_std = lax.rsqrt(rvar.astype(jnp.float32) + eps)
    scale = gamma.astype(jnp.float32) * inv_std
    bias = (cb.astype(jnp.float32) - rmean.astype(jnp.float32)) * scale \
        + beta.astype(jnp.float32)
    wf = w.astype(jnp.float32) * scale               # (3,3,Cin,Cout), f32

    # 3x3/s2 conv == 2x2/s1 conv over the space-to-depth input
    wt = jnp.zeros((2, 2, 2, 2, Cin, Cout), jnp.float32)
    for a in range(2):
        for b in range(2):
            for di in range(2):
                for dj in range(2):
                    i, j = 2 * a + di, 2 * b + dj
                    if i < kh and j < kw:
                        wt = wt.at[a, b, di, dj].set(wf[i, j])
    wt = wt.reshape(4, K4, Cout)
    wt = jnp.pad(wt, ((0, 0), (0, 0), (0, Coutp - Cout))).astype(compute_dtype)
    sb = jnp.pad(bias[None, :], ((0, 0), (0, Coutp - Cout)))       # (1,Coutp) f32

    flops = 2 * 4 * (N * T) * Mt * K4 * Coutp
    bytes_accessed = (zt.size * 2 + wt.size * 2 + sb.size * 4
                      + (N * T) * Mt * Coutp * 2)

    out = pl.pallas_call(
        functools.partial(_conv_bn_kernel, wz=Wz, m_rows=Mt),
        out_shape=jax.ShapeDtypeStruct((N * T, Mt, Coutp), compute_dtype),
        grid=(N * T,),
        in_specs=[
            pl.BlockSpec((None, Rt, K4), lambda g: (g, 0, 0)),
            pl.BlockSpec((4, K4, Coutp), lambda g: (0, 0, 0)),     # resident
            pl.BlockSpec((1, Coutp), lambda g: (0, 0)),            # resident
        ],
        out_specs=pl.BlockSpec((None, Mt, Coutp), lambda g: (g, 0, 0)),
        scratch_shapes=[pltpu.VMEM((Mt, Coutp), jnp.float32)],
        compiler_params=pltpu.CompilerParams(
            dimension_semantics=("parallel",),
            vmem_limit_bytes=32 * 1024 * 1024),
        cost_estimate=pl.CostEstimate(flops=flops, transcendentals=0,
                                      bytes_accessed=bytes_accessed),
    )(zt, wt, sb)

    # drop row / junk-column / channel padding, back to NCHW + original dtype
    y = out.reshape(N, T, Mt, Coutp)[:, :, :tp * Wz, :]
    y = y.reshape(N, T * tp, Wz, Coutp)[:, :Ho, :Wo, :Cout]
    return jnp.transpose(y, (0, 3, 1, 2)).astype(x_nchw.dtype)


# --------------------------------------------------------------------------
# Pure-JAX reference (lax.conv) mirroring the kernel's bf16 operand precision
# --------------------------------------------------------------------------
def _ref_forward(x_nchw, p, *, stride=2, eps=1e-5, compute_dtype=jnp.bfloat16):
    scale = p["gamma"] * lax.rsqrt(p["running_var"] + eps)
    bias = (p["b"] - p["running_mean"]) * scale + p["beta"]
    w_eff = (p["w"].astype(jnp.float32) * scale).astype(compute_dtype)
    x = jnp.transpose(x_nchw, (0, 2, 3, 1)).astype(compute_dtype)
    y = lax.conv_general_dilated(
        x, w_eff, window_strides=(stride, stride), padding=((1, 1), (1, 1)),
        dimension_numbers=("NHWC", "HWIO", "NHWC"),
        preferred_element_type=jnp.float32)
    y = (y + bias).astype(compute_dtype).astype(jnp.float32)
    return jnp.transpose(y, (0, 3, 1, 2)).astype(x_nchw.dtype)


# --------------------------------------------------------------------------
if __name__ == "__main__":
    key = jax.random.PRNGKey(0)
    ks = jax.random.split(key, 8)

    # Small shapes consistent with the module: batch=2, Cin=4, 16x16 -> Cout=32.
    N, Cin, H, W = 2, 4, 16, 16
    Cout, k = 32, 3

    params = {
        "w": jax.random.normal(ks[0], (k, k, Cin, Cout), jnp.float32) * 0.1,
        "b": jax.random.normal(ks[1], (Cout,), jnp.float32) * 0.05,
        "gamma": 1.0 + 0.1 * jax.random.normal(ks[2], (Cout,), jnp.float32),
        "beta": 0.05 * jax.random.normal(ks[3], (Cout,), jnp.float32),
        "running_mean": 0.05 * jax.random.normal(ks[4], (Cout,), jnp.float32),
        "running_var": 0.5 + jax.random.uniform(ks[5], (Cout,), jnp.float32),
    }
    x = jax.random.normal(ks[6], (N, Cin, H, W), jnp.float32)

    y_ref = jax.block_until_ready(_ref_forward(x, params))

    # Exercise both the whole-image path (T=1) and the row-tiled halo path (T=2).
    for tr in (None, 4):
        y = middle_embedding_forward(x, params, tile_rows=tr)
        y = jax.block_until_ready(y)
        assert y.shape == (N, Cout, H // 2, W // 2), y.shape
        err = float(jnp.max(jnp.abs(y - y_ref)))
        assert jnp.allclose(y, y_ref, atol=3e-2, rtol=3e-2), (tr, err)

    print("KERNEL_OK")
</pallas_src>

<mosaic_0001>
module attributes {stable_mosaic.version = 11 : i64} {
  func.func @_conv_bn_kernel(%arg0: i32, %arg1: memref<1x88x16xbf16, #tpu.memory_space<vmem>>, %arg2: memref<4x16x128xbf16, #tpu.memory_space<vmem>>, %arg3: memref<1x128xf32, #tpu.memory_space<vmem>>, %arg4: memref<1x72x128xbf16, #tpu.memory_space<vmem>>, %arg5: memref<72x128xf32, #tpu.memory_space<vmem>>) attributes {dimension_semantics = [#tpu.dimension_semantics<parallel>], iteration_bounds = array<i64: 2>, scalar_prefetch = 0 : i64, scratch_operands = 1 : i64, tpu.core_type = #tpu.core_type<tc>, window_params = [{transform_indices = @transform_0, window_bounds = array<i64: 1, 88, 16>}, {pipeline_mode = #tpu.pipeline_mode<synchronous>, transform_indices = @transform_1, window_bounds = array<i64: 4, 16, 128>}, {pipeline_mode = #tpu.pipeline_mode<synchronous>, transform_indices = @transform_2, window_bounds = array<i64: 1, 128>}, {transform_indices = @transform_3, window_bounds = array<i64: 1, 72, 128>}]} {
    %c0 = arith.constant 0 : index
    %c0_0 = arith.constant 0 : index
    %c0_1 = arith.constant 0 : index
    %0 = vector.load %arg1[%c0, %c0_0, %c0_1] : memref<1x88x16xbf16, #tpu.memory_space<vmem>>, vector<1x72x16xbf16>
    %1 = vector.shape_cast %0 : vector<1x72x16xbf16> to vector<72x16xbf16>
    %c0_2 = arith.constant 0 : index
    %c0_3 = arith.constant 0 : index
    %c0_4 = arith.constant 0 : index
    %2 = vector.load %arg2[%c0_2, %c0_3, %c0_4] : memref<4x16x128xbf16, #tpu.memory_space<vmem>>, vector<1x16x128xbf16>
    %3 = vector.shape_cast %2 : vector<1x16x128xbf16> to vector<16x128xbf16>
    %cst = arith.constant dense<0.000000e+00> : vector<72x128xf32>
    %4 = tpu.matmul %1, %3, %cst {dimension_numbers = #tpu.dot_dimension_numbers<[1], [0], [0], [1], [0, 0, 1, 1], [], []>} : vector<72x16xbf16>, vector<16x128xbf16>, vector<72x128xf32> -> vector<72x128xf32>
    %c0_5 = arith.constant 0 : index
    %c0_6 = arith.constant 0 : index
    %5 = vector.load %arg5[%c0_5, %c0_6] : memref<72x128xf32, #tpu.memory_space<vmem>>, vector<72x128xf32>
    tpu.vector_store %arg5[%c0_5, %c0_6], %4 {strides = array<i32>} : memref<72x128xf32, #tpu.memory_space<vmem>>, vector<72x128xf32>,
    %c0_7 = arith.constant 0 : index
    %c0_8 = arith.constant 0 : index
    %6 = vector.load %arg5[%c0_7, %c0_8] : memref<72x128xf32, #tpu.memory_space<vmem>>, vector<72x128xf32>
    %c0_9 = arith.constant 0 : index
    %c1 = arith.constant 1 : index
    %c0_10 = arith.constant 0 : index
    %7 = vector.load %arg1[%c0_9, %c1, %c0_10] : memref<1x88x16xbf16, #tpu.memory_space<vmem>>, vector<1x72x16xbf16>
    %8 = vector.shape_cast %7 : vector<1x72x16xbf16> to vector<72x16xbf16>
    %c1_11 = arith.constant 1 : index
    %c0_12 = arith.constant 0 : index
    %c0_13 = arith.constant 0 : index
    %9 = vector.load %arg2[%c1_11, %c0_12, %c0_13] : memref<4x16x128xbf16, #tpu.memory_space<vmem>>, vector<1x16x128xbf16>
    %10 = vector.shape_cast %9 : vector<1x16x128xbf16> to vector<16x128xbf16>
    %cst_14 = arith.constant dense<0.000000e+00> : vector<72x128xf32>
    %11 = tpu.matmul %8, %10, %cst_14 {dimension_numbers = #tpu.dot_dimension_numbers<[1], [0], [0], [1], [0, 0, 1, 1], [], []>} : vector<72x16xbf16>, vector<16x128xbf16>, vector<72x128xf32> -> vector<72x128xf32>
    %12 = arith.addf %6, %11 : vector<72x128xf32>
    %c0_15 = arith.constant 0 : index
    %c0_16 = arith.constant 0 : index
    %13 = vector.load %arg5[%c0_15, %c0_16] : memref<72x128xf32, #tpu.memory_space<vmem>>, vector<72x128xf32>
    tpu.vector_store %arg5[%c0_15, %c0_16], %12 {strides = array<i32>} : memref<72x128xf32, #tpu.memory_space<vmem>>, vector<72x128xf32>,
    %c0_17 = arith.constant 0 : index
    %c0_18 = arith.constant 0 : index
    %14 = vector.load %arg5[%c0_17, %c0_18] : memref<72x128xf32, #tpu.memory_space<vmem>>, vector<72x128xf32>
    %c0_19 = arith.constant 0 : index
    %c9 = arith.constant 9 : index
    %c0_20 = arith.constant 0 : index
    %15 = vector.load %arg1[%c0_19, %c9, %c0_20] : memref<1x88x16xbf16, #tpu.memory_space<vmem>>, vector<1x72x16xbf16>
    %16 = vector.shape_cast %15 : vector<1x72x16xbf16> to vector<72x16xbf16>
    %c2 = arith.constant 2 : index
    %c0_21 = arith.constant 0 : index
    %c0_22 = arith.constant 0 : index
    %17 = vector.load %arg2[%c2, %c0_21, %c0_22] : memref<4x16x128xbf16, #tpu.memory_space<vmem>>, vector<1x16x128xbf16>
    %18 = vector.shape_cast %17 : vector<1x16x128xbf16> to vector<16x128xbf16>
    %cst_23 = arith.constant dense<0.000000e+00> : vector<72x128xf32>
    %19 = tpu.matmul %16, %18, %cst_23 {dimension_numbers = #tpu.dot_dimension_numbers<[1], [0], [0], [1], [0, 0, 1, 1], [], []>} : vector<72x16xbf16>, vector<16x128xbf16>, vector<72x128xf32> -> vector<72x128xf32>
    %20 = arith.addf %14, %19 : vector<72x128xf32>
    %c0_24 = arith.constant 0 : index
    %c0_25 = arith.constant 0 : index
    %21 = vector.load %arg5[%c0_24, %c0_25] : memref<72x128xf32, #tpu.memory_space<vmem>>, vector<72x128xf32>
    tpu.vector_store %arg5[%c0_24, %c0_25], %20 {strides = array<i32>} : memref<72x128xf32, #tpu.memory_space<vmem>>, vector<72x128xf32>,
    %c0_26 = arith.constant 0 : index
    %c0_27 = arith.constant 0 : index
    %22 = vector.load %arg5[%c0_26, %c0_27] : memref<72x128xf32, #tpu.memory_space<vmem>>, vector<72x128xf32>
    %c0_28 = arith.constant 0 : index
    %c10 = arith.constant 10 : index
    %c0_29 = arith.constant 0 : index
    %23 = vector.load %arg1[%c0_28, %c10, %c0_29] : memref<1x88x16xbf16, #tpu.memory_space<vmem>>, vector<1x72x16xbf16>
    %24 = vector.shape_cast %23 : vector<1x72x16xbf16> to vector<72x16xbf16>
    %c3 = arith.constant 3 : index
    %c0_30 = arith.constant 0 : index
    %c0_31 = arith.constant 0 : index
    %25 = vector.load %arg2[%c3, %c0_30, %c0_31] : memref<4x16x128xbf16, #tpu.memory_space<vmem>>, vector<1x16x128xbf16>
    %26 = vector.shape_cast %25 : vector<1x16x128xbf16> to vector<16x128xbf16>
    %cst_32 = arith.constant dense<0.000000e+00> : vector<72x128xf32>
    %27 = tpu.matmul %24, %26, %cst_32 {dimension_numbers = #tpu.dot_dimension_numbers<[1], [0], [0], [1], [0, 0, 1, 1], [], []>} : vector<72x16xbf16>, vector<16x128xbf16>, vector<72x128xf32> -> vector<72x128xf32>
    %28 = arith.addf %22, %27 : vector<72x128xf32>
    %c0_33 = arith.constant 0 : index
    %c0_34 = arith.constant 0 : index
    %29 = vector.load %arg5[%c0_33, %c0_34] : memref<72x128xf32, #tpu.memory_space<vmem>>, vector<72x128xf32>
    tpu.vector_store %arg5[%c0_33, %c0_34], %28 {strides = array<i32>} : memref<72x128xf32, #tpu.memory_space<vmem>>, vector<72x128xf32>,
    %c0_35 = arith.constant 0 : index
    %c0_36 = arith.constant 0 : index
    %30 = vector.load %arg5[%c0_35, %c0_36] : memref<72x128xf32, #tpu.memory_space<vmem>>, vector<72x128xf32>
    %c0_37 = arith.constant 0 : index
    %c0_38 = arith.constant 0 : index
    %31 = vector.load %arg3[%c0_37, %c0_38] : memref<1x128xf32, #tpu.memory_space<vmem>>, vector<1x128xf32>
    %32 = vector.broadcast %31 : vector<1x128xf32> to vector<72x128xf32>
    %33 = arith.addf %30, %32 : vector<72x128xf32>
    %34 = arith.truncf %33 : vector<72x128xf32> to vector<72x128xbf16>
    %c0_39 = arith.constant 0 : index
    %c0_40 = arith.constant 0 : index
    %c0_41 = arith.constant 0 : index
    %35 = vector.load %arg4[%c0_39, %c0_40, %c0_41] : memref<1x72x128xbf16, #tpu.memory_space<vmem>>, vector<1x72x128xbf16>
    %36 = vector.shape_cast %35 : vector<1x72x128xbf16> to vector<72x128xbf16>
    %37 = vector.shape_cast %34 : vector<72x128xbf16> to vector<1x72x128xbf16>
    tpu.vector_store %arg4[%c0_39, %c0_40, %c0_41], %37 {strides = array<i32>} : memref<1x72x128xbf16, #tpu.memory_space<vmem>>, vector<1x72x128xbf16>,
    return
  }
  func.func @transform_0(%arg0: i32) -> (i32, i32, i32) {
    %c0_i32 = arith.constant 0 : i32
    %c0_i32_0 = arith.constant 0 : i32
    %c0_i32_1 = arith.constant 0 : i32
    return %arg0, %c0_i32, %c0_i32_0 : i32, i32, i32
  }
  func.func @transform_1(%arg0: i32) -> (i32, i32, i32) {
    %c0_i32 = arith.constant 0 : i32
    %c0_i32_0 = arith.constant 0 : i32
    %c0_i32_1 = arith.constant 0 : i32
    %c0_i32_2 = arith.constant 0 : i32
    return %c0_i32, %c0_i32_0, %c0_i32_1 : i32, i32, i32
  }
  func.func @transform_2(%arg0: i32) -> (i32, i32) {
    %c0_i32 = arith.constant 0 : i32
    %c0_i32_0 = arith.constant 0 : i32
    %c0_i32_1 = arith.constant 0 : i32
    return %c0_i32, %c0_i32_0 : i32, i32
  }
  func.func @transform_3(%arg0: i32) -> (i32, i32, i32) {
    %c0_i32 = arith.constant 0 : i32
    %c0_i32_0 = arith.constant 0 : i32
    %c0_i32_1 = arith.constant 0 : i32
    return %arg0, %c0_i32, %c0_i32_0 : i32, i32, i32
  }
}

</mosaic_0001>

<llo_original>
// kernel: tpu_custom_call.1
$region0: #{tpu_custom_call.1}
  #allocation0 [shape = 'u32[]', space=smem, size = 0x4, offset = 0x4, fixed_abs, tag = 'smem constant byte address 0x4 - core index']
  #allocation1 [shape = 'u32[144,128]{1,0:T(1,128)}', space=vmem, size = 0x12000, scoped, tag = 'internal scratch']
  #allocation2 [shape = 'f32[72,128]{1,0:T(8,128)}', space=vmem, size = 0x9000, scoped, tag = 'scratch operand']
  %s0 = inlined_call_operand.vmem [shape: bf16[2,88,16], index: 0, kind: input, shape index: {}]
  %s1 = inlined_call_operand.vmem [shape: bf16[4,16,128], index: 1, kind: input, shape index: {}]
  %s2 = inlined_call_operand.vmem [shape: f32[1,128], index: 2, kind: input, shape index: {}]
  %s3 = inlined_call_operand.hbm [shape: bf16[2,72,128], index: 3, kind: output, shape index: {}]
  %s4 = sld [smem:[#allocation0]]
  $region45: #{tpu_custom_call.1} parent=0
    _
  %s6 = ssub.s32 1, %s4
  %s7 = scalar_select 0, %s6, %s4
  $region1: #{tpu_custom_call.1} parent=0
    #allocation3 [shape = 'u8[36864]{0}', space=vmem, size = 0x9000, scoped, tag = 'output window, operand 0']
    #allocation4 [shape = 's32[2]{0}', space=sflag, size = 0x8, scoped, tag = 'scoped memory for tpu_custom_call.1']
    %8 = vsyncpa [#allocation4], 0
    %s9 = scalar_lea.sflag [#allocation4], 1
    %10 = vsyncpa %s9, 0
    loop: start=0, step=1, limit=4
    $region2: #{tpu_custom_call.1} parent=1 // loop_pre_header
      _
    $region3: #{tpu_custom_call.1} parent=1 // loop_header
      %s12 = sphi 0, %s16
      %p13 = scmp.ge.s32.totalorder %s12, 4
      %s22 = sphi 0, %s24
      %s25 = sphi 0, %s22
      %s26 = sphi 0, %s25
      %s42 = sphi 0, %s26
      %s46 = sphi 0, %s46
      %s48 = sphi 0, %s46
      %s49 = sphi 0, %s48
      %s63 = sphi 0, %s49
      %s67 = sphi 0, %s67
      %s69 = sphi 0, %s67
      %s70 = sphi 0, %s69
      %s84 = sphi 0, %s70
      %s90 = sphi 0, %s92
      %s93 = sphi 0, %s90
      %s94 = sphi 0, %s93
      %s110 = sphi 0, %s94
    $region4: #{tpu_custom_call.1} parent=1 // loop_header_branch
      %15 = sbr.rel (%p13) target = $region8
    $region5: #{tpu_custom_call.1} parent=1 // loop_body
      %s17 = ssub.s32 %s12, 1
      %s18 = ssub.s32 %s12, 2
      %s19 = sadd.s32 %s12, 1
      %s20 = ssub.s32 %s12, %s19
      %p21 = scmp.eq.s32.totalorder %s20, 0
      %s23 = sadd.s32 %s22, 1
      %s24 = scalar_select %p21, %s22, %s23
      %p27 = pneg %p21
      %p28 = scmp.eq.s32.totalorder %s12, 1
      %p29 = por %p27, %p28
      %p30 = scmp.ne.s32.totalorder %s22, %s25
      %p31 = scmp.eq.s32.totalorder %s12, 0
      %p32 = por %p30, %p31
      %p33 = scmp.ne.s32.totalorder %s22, %s25
      %p34 = scmp.eq.s32.totalorder %s17, 1
      %p35 = por %p33, %p34
      %p36 = scmp.ne.s32.totalorder %s25, %s26
      %p37 = scmp.eq.s32.totalorder %s17, 0
      %p38 = por %p36, %p37
      %p39 = scmp.ne.s32.totalorder %s25, %s26
      %p40 = scmp.eq.s32.totalorder %s18, 1
      %p41 = por %p39, %p40
      %p43 = scmp.ne.s32.totalorder %s26, %s42
      %p44 = scmp.eq.s32.totalorder %s18, 0
      %p45 = por %p43, %p44
      %s47 = sadd.s32 %s46, 1
      %p50 = scmp.eq.s32.totalorder %s12, 1
      %p51 = scmp.ne.s32.totalorder %s46, %s48
      %p52 = scmp.eq.s32.totalorder %s12, 0
      %p53 = por %p51, %p52
      %p54 = scmp.ne.s32.totalorder %s46, %s48
      %p55 = scmp.eq.s32.totalorder %s17, 1
      %p56 = por %p54, %p55
      %p57 = scmp.ne.s32.totalorder %s48, %s49
      %p58 = scmp.eq.s32.totalorder %s17, 0
      %p59 = por %p57, %p58
      %p60 = scmp.ne.s32.totalorder %s48, %s49
      %p61 = scmp.eq.s32.totalorder %s18, 1
      %p62 = por %p60, %p61
      %p64 = scmp.ne.s32.totalorder %s49, %s63
      %p65 = scmp.eq.s32.totalorder %s18, 0
      %p66 = por %p64, %p65
      %s68 = sadd.s32 %s67, 1
      %p71 = scmp.eq.s32.totalorder %s12, 1
      %p72 = scmp.ne.s32.totalorder %s67, %s69
      %p73 = scmp.eq.s32.totalorder %s12, 0
      %p74 = por %p72, %p73
      %p75 = scmp.ne.s32.totalorder %s67, %s69
      %p76 = scmp.eq.s32.totalorder %s17, 1
      %p77 = por %p75, %p76
      %p78 = scmp.ne.s32.totalorder %s69, %s70
      %p79 = scmp.eq.s32.totalorder %s17, 0
      %p80 = por %p78, %p79
      %p81 = scmp.ne.s32.totalorder %s69, %s70
      %p82 = scmp.eq.s32.totalorder %s18, 1
      %p83 = por %p81, %p82
      %p85 = scmp.ne.s32.totalorder %s70, %s84
      %p86 = scmp.eq.s32.totalorder %s18, 0
      %p87 = por %p85, %p86
      %s88 = ssub.s32 %s12, %s19
      %p89 = scmp.eq.s32.totalorder %s88, 0
      %s91 = sadd.s32 %s90, 1
      %s92 = scalar_select %p89, %s90, %s91
      %p95 = pneg %p89
      %p96 = scmp.eq.s32.totalorder %s12, 1
      %p97 = por %p95, %p96
      %p98 = scmp.ne.s32.totalorder %s90, %s93
      %p99 = scmp.eq.s32.totalorder %s12, 0
      %p100 = por %p98, %p99
      %p101 = scmp.ne.s32.totalorder %s90, %s93
      %p102 = scmp.eq.s32.totalorder %s17, 1
      %p103 = por %p101, %p102
      %p104 = scmp.ne.s32.totalorder %s93, %s94
      %p105 = scmp.eq.s32.totalorder %s17, 0
      %p106 = por %p104, %p105
      %p107 = scmp.ne.s32.totalorder %s93, %s94
      %p108 = scmp.eq.s32.totalorder %s18, 1
      %p109 = por %p107, %p108
      %p111 = scmp.ne.s32.totalorder %s94, %s110
      %p112 = scmp.eq.s32.totalorder %s18, 0
      %p113 = por %p111, %p112
      %p114 = scmp.le.s32.totalorder 1, %s12
      %p115 = scmp.lt.s32.totalorder %s12, 3
      %p116 = pnand %p114, %p115
      %p117 = pneg %p116
      // Predicated region
      $region9: #{tpu_custom_call.1} parent=5 // pred_check
        _
      $region10: #{tpu_custom_call.1} parent=5 // pred_check_branch
        %119 = sbr.rel (%p116) target = $region12
      $region11: #{tpu_custom_call.1} parent=5 // pred_region
        %s120 = ssub.s32 %s12, 1
        // Predicated region
        $region13: #{tpu_custom_call.1} parent=11 // pred_check
          %p121 = pneg %p59
        $region14: #{tpu_custom_call.1} parent=11 // pred_check_branch
          %123 = sbr.rel (%p121) target = $region16
        $region15: #{tpu_custom_call.1} parent=11 // pred_region
          _
        $region16: #{tpu_custom_call.1} parent=11 // pred_fallthru
          _
        // Predicated region
        $region17: #{tpu_custom_call.1} parent=11 // pred_check
          %p124 = pneg %p80
        $region18: #{tpu_custom_call.1} parent=11 // pred_check_branch
          %126 = sbr.rel (%p124) target = $region20
        $region19: #{tpu_custom_call.1} parent=11 // pred_region
          _
        $region20: #{tpu_custom_call.1} parent=11 // pred_fallthru
          _
      $region12: #{tpu_custom_call.1} parent=5 // pred_fallthru
        _
      %p127 = scmp.lt.s32.totalorder %s12, 2
      // Predicated region
      $region21: #{tpu_custom_call.1} parent=5 // pred_check
        %p128 = pneg %p127
      $region22: #{tpu_custom_call.1} parent=5 // pred_check_branch
        %130 = sbr.rel (%p128) target = $region24
      $region23: #{tpu_custom_call.1} parent=5 // pred_region
        // Predicated region
        $region25: #{tpu_custom_call.1} parent=23 // pred_check
          %p131 = pneg %p32
        $region26: #{tpu_custom_call.1} parent=23 // pred_check_branch
          %133 = sbr.rel (%p131) target = $region28
        $region27: #{tpu_custom_call.1} parent=23 // pred_region
          %p134 = scmp.lt.s32.totalorder %s12, 1
          %s135 = scalar_select %p134, %s12, 1
          %s136 = smul.addr %s135, 11
          %s137 = smul.addr %s136, 4
          %s138 = scalar_lea.vmem %s0, %s137
        $region28: #{tpu_custom_call.1} parent=23 // pred_fallthru
          _
      $region24: #{tpu_custom_call.1} parent=5 // pred_fallthru
        _
      %p139 = scmp.le.s32.totalorder 1, %s12
      %p140 = scmp.lt.s32.totalorder %s12, 3
      %p141 = pnand %p139, %p140
      %p142 = pneg %p141
      // Predicated region
      $region29: #{tpu_custom_call.1} parent=5 // pred_check
        _
      $region30: #{tpu_custom_call.1} parent=5 // pred_check_branch
        %144 = sbr.rel (%p141) target = $region32
      $region31: #{tpu_custom_call.1} parent=5 // pred_region
        %s145 = ssub.s32 %s12, 1
        %p146 = scmp.lt.s32.totalorder %s17, 1
        %s147 = scalar_select %p146, %s17, 1
        %s148 = smul.addr %s147, 11
        %s149 = smul.addr %s148, 4
        %s150 = scalar_lea.vmem %s0, %s149
        %p151 = pneg %p38
        %p152 = pneg %p35
        %p153 = pneg %p59
        %p154 = pneg %p56
        %p155 = pneg %p80
        %p156 = pneg %p77
        %p157 = pneg %p106
        %p158 = pneg %p103
        %s159 = sand.u32 %s93, 1
        %s160 = scalar_lea.sflag [#allocation4], %s159
        %s161 = sand.u32 %s93, 1
        %s162 = smul.addr %s161, 36
        %s163 = scalar_lea.vmem [#allocation3], %s162
        %p164 = scmp.lt.s32.totalorder %s17, 1
        %s165 = scalar_select %p164, %s17, 1
        %s166 = smul.addr %s165, 11
        %s167 = smul.addr %s166, 4
        %s168 = scalar_lea.vmem %s0, %s167
        %v170 = vld [vmem:[%s168] sm:$0xf]
        %v171 = vld [vmem:[%s168 + $0x4] sm:$0xf]
        %v172 = vld [vmem:[%s168 + $0x8] sm:$0xf]
        %v173 = vld [vmem:[%s168 + $0xc] sm:$0xf]
        %v174 = vld [vmem:[%s168 + $0x10] sm:$0xf]
        %v175 = vld [vmem:[%s168 + $0x14] sm:$0xf]
        %v176 = vld [vmem:[%s168 + $0x18] sm:$0xf]
        %v177 = vld [vmem:[%s168 + $0x1c] sm:$0xf]
        %v178 = vld [vmem:[%s168 + $0x20] sm:$0xf]
        %v179 = vld [vmem:[%s1] sm:$0xf]
        %v180 = vld [vmem:[%s1 + $0x4] sm:$0xf]
        %v190 = vunpack.c.l.b16 %v170
        %v191 = vunpack.c.l.b16 %v171
        %v192 = vunpack.c.l.b16 %v172
        %v193 = vunpack.c.l.b16 %v173
        %v194 = vunpack.c.l.b16 %v174
        %v195 = vunpack.c.l.b16 %v175
        %v196 = vunpack.c.l.b16 %v176
        %v197 = vunpack.c.l.b16 %v177
        %v198 = vunpack.c.l.b16 %v178
        %v199 = vpack.c.b16 %v191, %v190
        %v200 = vpack.c.b16 %v193, %v192
        %v201 = vpack.c.b16 %v195, %v194
        %v202 = vpack.c.b16 %v197, %v196
        %v203 = vpack.c.b16 %v198, %v198
        %v206 = vunpack.c.l.b16 %v179
        %v207 = vunpack.c.l.b16 %v180
        %v208 = vpack.c.b16 %v207, %v206
        %vm210 = vcmask 130048
        %v212 = vsel %vm210, %v199, 0
        %v215 = vsel %vm210, %v200, 0
        %v218 = vsel %vm210, %v201, 0
        %v221 = vsel %vm210, %v202, 0
        %v224 = vsel %vm210, %v203, 0
        %226 = vmatprep.subr.bf16.mxu0 0
        %227 = vmatpush1.bf16.msra.mxu0 0
        %228 = vmatprep.subr.bf16.mxu0 0
        %229 = vmatpush1.bf16.msra.mxu0 0
        %230 = vmatprep.subr.bf16.mxu0 0
        %231 = vmatpush1.bf16.msra.mxu0 0
        %232 = vmatprep.subr.bf16.mxu0 0
        %233 = vmatpush1.bf16.msra.mxu0 0
        %234 = vmatprep.subr.bf16.mxu0 0
        %235 = vmatpush1.bf16.msra.mxu0 0
        %236 = vmatprep.subr.bf16.mxu0 0
        %237 = vmatpush1.bf16.msra.mxu0 0
        %238 = vmatprep.subr.bf16.mxu0 0
        %239 = vmatpush1.bf16.msra.mxu0 0
        %240 = vmatprep.subr.bf16.mxu0 0
        %241 = vmatpush1.bf16.msra.mxu0 %v208
        %242 = vmatprep.subr.bf16.mxu0 0
        %243 = vmatpush2.bf16.msra.mxu0 0
        %244 = vmatprep.subr.bf16.mxu0 0
        %245 = vmatpush2.bf16.msra.mxu0 0
        %246 = vmatprep.subr.bf16.mxu0 0
        %247 = vmatpush2.bf16.msra.mxu0 0
        %248 = vmatprep.subr.bf16.mxu0 0
        %249 = vmatpush2.bf16.msra.mxu0 0
        %250 = vmatprep.subr.bf16.mxu0 0
        %251 = vmatpush2.bf16.msra.mxu0 0
        %252 = vmatprep.subr.bf16.mxu0 0
        %253 = vmatpush2.bf16.msra.mxu0 0
        %254 = vmatprep.subr.bf16.mxu0 0
        %255 = vmatpush2.bf16.msra.mxu0 0
        %256 = vmatprep.subr.bf16.mxu0 0
        %257 = vmatpush2.bf16.msra.mxu0 0
        %258 = vmatprep.mubr.bf16.mxu0 0
        %259 = vmatmul.mubr.bf16.gmra.mxu0 %v212
        %v260 = vpop.f32.mrf.mxu0
        %v261 = vadd.f32 0.0, %v260
        %v262 = vpop.f32.mrf.mxu0
        %v263 = vpop.f32.mrf.mxu0
        %v264 = vadd.f32 0.0, %v263
        %v265 = vpop.f32.mrf.mxu0
        %266 = vmatprep.mubr.bf16.mxu0 0
        %267 = vmatmul.mubr.bf16.gmra.mxu0 %v215
        %v268 = vpop.f32.mrf.mxu0
        %v269 = vadd.f32 0.0, %v268
        %v270 = vpop.f32.mrf.mxu0
        %v271 = vpop.f32.mrf.mxu0
        %v272 = vadd.f32 0.0, %v271
        %v273 = vpop.f32.mrf.mxu0
        %274 = vmatprep.mubr.bf16.mxu0 0
        %275 = vmatmul.mubr.bf16.gmra.mxu0 %v218
        %v276 = vpop.f32.mrf.mxu0
        %v277 = vadd.f32 0.0, %v276
        %v278 = vpop.f32.mrf.mxu0
        %v279 = vpop.f32.mrf.mxu0
        %v280 = vadd.f32 0.0, %v279
        %v281 = vpop.f32.mrf.mxu0
        %282 = vmatprep.mubr.bf16.mxu0 0
        %283 = vmatmul.mubr.bf16.gmra.mxu0 %v221
        %v284 = vpop.f32.mrf.mxu0
        %v285 = vadd.f32 0.0, %v284
        %v286 = vpop.f32.mrf.mxu0
        %v287 = vpop.f32.mrf.mxu0
        %v288 = vadd.f32 0.0, %v287
        %v289 = vpop.f32.mrf.mxu0
        %290 = vmatprep.mubr.bf16.mxu0 0
        %291 = vmatmul.mubr.bf16.gmra.mxu0 %v224
        %v292 = vpop.f32.mrf.mxu0
        %v293 = vadd.f32 0.0, %v292
        %v294 = vpop.f32.mrf.mxu0
        %v295 = vpop.f32.mrf.mxu0
        %v296 = vpop.f32.mrf.mxu0
        %297 = vdwg.mxu0
        %298 = vst [vmem:[#allocation2] sm:$0xff] %v261
        %299 = vst [vmem:[#allocation2 + $0x8] sm:$0xff] %v264
        %300 = vst [vmem:[#allocation2 + $0x10] sm:$0xff] %v269
        %301 = vst [vmem:[#allocation2 + $0x18] sm:$0xff] %v272
        %302 = vst [vmem:[#allocation2 + $0x20] sm:$0xff] %v277
        %303 = vst [vmem:[#allocation2 + $0x28] sm:$0xff] %v280
        %304 = vst [vmem:[#allocation2 + $0x30] sm:$0xff] %v285
        %305 = vst [vmem:[#allocation2 + $0x38] sm:$0xff] %v288
        %306 = vst [vmem:[#allocation2 + $0x40] sm:$0xff] %v293
        %v307 = vld [vmem:[#allocation2] sm:$0xff]
        %v308 = vld [vmem:[#allocation2 + $0x8] sm:$0xff]
        %v309 = vld [vmem:[#allocation2 + $0x10] sm:$0xff]
        %v310 = vld [vmem:[#allocation2 + $0x18] sm:$0xff]
        %v311 = vld [vmem:[#allocation2 + $0x20] sm:$0xff]
        %v312 = vld [vmem:[#allocation2 + $0x28] sm:$0xff]
        %v313 = vld [vmem:[#allocation2 + $0x30] sm:$0xff]
        %v314 = vld [vmem:[#allocation2 + $0x38] sm:$0xff]
        %v315 = vld [vmem:[#allocation2 + $0x40] sm:$0xff]
        %v316 = vld [vmem:[%s168] sm:$0xf]
        %v317 = vld [vmem:[%s168 + $0x4] sm:$0xf]
        %v318 = vld [vmem:[%s168 + $0x8] sm:$0xf]
        %v319 = vld [vmem:[%s168 + $0xc] sm:$0xf]
        %v320 = vld [vmem:[%s168 + $0x10] sm:$0xf]
        %v321 = vld [vmem:[%s168 + $0x14] sm:$0xf]
        %v322 = vld [vmem:[%s168 + $0x18] sm:$0xf]
        %v323 = vld [vmem:[%s168 + $0x1c] sm:$0xf]
        %v324 = vld [vmem:[%s168 + $0x20] sm:$0xf]
        %v325 = vld [vmem:[%s168 + $0x24] sm:$0x1]
        %s326 = scalar_lea.vmem %s1, 8
        %v327 = vld [vmem:[%s326] sm:$0xf]
        %v328 = vld [vmem:[%s326 + $0x4] sm:$0xf]
        %v339 = vunpack.c.l.b16 %v316
        %v340 = vunpack.c.l.b16 %v317
        %v341 = vunpack.c.l.b16 %v318
        %v342 = vunpack.c.l.b16 %v319
        %v343 = vunpack.c.l.b16 %v320
        %v344 = vunpack.c.l.b16 %v321
        %v345 = vunpack.c.l.b16 %v322
        %v346 = vunpack.c.l.b16 %v323
        %v347 = vunpack.c.l.b16 %v324
        %v348 = vunpack.c.l.b16 %v325
        %v349 = vpack.c.b16 %v340, %v339
        %v350 = vpack.c.b16 %v342, %v341
        %v351 = vpack.c.b16 %v344, %v343
        %v352 = vpack.c.b16 %v346, %v345
        %v353 = vpack.c.b16 %v348, %v347
        %vm354 = vsmask.f32 7424
        %v356 = vshrl.u32 %v349, 16
        %v358 = vshll.u32 %v349, 16
        %v360 = vrot.slane %v358, 1
        %v361 = vor.u32 %v356, %v360
        %v363 = vshll.u32 %v350, 16
        %v365 = vrot.slane %v363, 1
        %v366 = vsel %vm354, %v361, %v365
        %v367 = vshrl.u32 %v350, 16
        %v369 = vor.u32 %v367, %v365
        %v371 = vshll.u32 %v351, 16
        %v373 = vrot.slane %v371, 1
        %v374 = vsel %vm354, %v369, %v373
        %v375 = vshrl.u32 %v351, 16
        %v377 = vor.u32 %v375, %v373
        %v379 = vshll.u32 %v352, 16
        %v381 = vrot.slane %v379, 1
        %v382 = vsel %vm354, %v377, %v381
        %v383 = vshrl.u32 %v352, 16
        %v385 = vor.u32 %v383, %v381
        %v387 = vshll.u32 %v353, 16
        %v389 = vrot.slane %v387, 1
        %v390 = vsel %vm354, %v385, %v389
        %v391 = vshrl.u32 %v353, 16
        %v393 = vor.u32 %v391, %v389
        %v396 = vunpack.c.l.b16 %v327
        %v397 = vunpack.c.l.b16 %v328
        %v398 = vpack.c.b16 %v397, %v396
        %v401 = vsel %vm210, %v366, 0
        %v404 = vsel %vm210, %v374, 0
        %v407 = vsel %vm210, %v382, 0
        %v410 = vsel %vm210, %v390, 0
        %v413 = vsel %vm210, %v393, 0
        %415 = vmatprep.subr.bf16.mxu0 0
        %416 = vmatpush1.bf16.msra.mxu0 0
        %417 = vmatprep.subr.bf16.mxu0 0
        %418 = vmatpush1.bf16.msra.mxu0 0
        %419 = vmatprep.subr.bf16.mxu0 0
        %420 = vmatpush1.bf16.msra.mxu0 0
        %421 = vmatprep.subr.bf16.mxu0 0
        %422 = vmatpush1.bf16.msra.mxu0 0
        %423 = vmatprep.subr.bf16.mxu0 0
        %424 = vmatpush1.bf16.msra.mxu0 0
        %425 = vmatprep.subr.bf16.mxu0 0
        %426 = vmatpush1.bf16.msra.mxu0 0
        %427 = vmatprep.subr.bf16.mxu0 0
        %428 = vmatpush1.bf16.msra.mxu0 0
        %429 = vmatprep.subr.bf16.mxu0 0
        %430 = vmatpush1.bf16.msra.mxu0 %v398
        %431 = vmatprep.subr.bf16.mxu0 0
        %432 = vmatpush2.bf16.msra.mxu0 0
        %433 = vmatprep.subr.bf16.mxu0 0
        %434 = vmatpush2.bf16.msra.mxu0 0
        %435 = vmatprep.subr.bf16.mxu0 0
        %436 = vmatpush2.bf16.msra.mxu0 0
        %437 = vmatprep.subr.bf16.mxu0 0
        %438 = vmatpush2.bf16.msra.mxu0 0
        %439 = vmatprep.subr.bf16.mxu0 0
        %440 = vmatpush2.bf16.msra.mxu0 0
        %441 = vmatprep.subr.bf16.mxu0 0
        %442 = vmatpush2.bf16.msra.mxu0 0
        %443 = vmatprep.subr.bf16.mxu0 0
        %444 = vmatpush2.bf16.msra.mxu0 0
        %445 = vmatprep.subr.bf16.mxu0 0
        %446 = vmatpush2.bf16.msra.mxu0 0
        %447 = vmatprep.mubr.bf16.mxu0 0
        %448 = vmatmul.mubr.bf16.gmra.mxu0 %v401
        %v449 = vpop.f32.mrf.mxu0
        %v450 = vadd.f32 0.0, %v449
        %v451 = vpop.f32.mrf.mxu0
        %v452 = vpop.f32.mrf.mxu0
        %v453 = vadd.f32 0.0, %v452
        %v454 = vpop.f32.mrf.mxu0
        %455 = vmatprep.mubr.bf16.mxu0 0
        %456 = vmatmul.mubr.bf16.gmra.mxu0 %v404
        %v457 = vpop.f32.mrf.mxu0
        %v458 = vadd.f32 0.0, %v457
        %v459 = vpop.f32.mrf.mxu0
        %v460 = vpop.f32.mrf.mxu0
        %v461 = vadd.f32 0.0, %v460
        %v462 = vpop.f32.mrf.mxu0
        %463 = vmatprep.mubr.bf16.mxu0 0
        %464 = vmatmul.mubr.bf16.gmra.mxu0 %v407
        %v465 = vpop.f32.mrf.mxu0
        %v466 = vadd.f32 0.0, %v465
        %v467 = vpop.f32.mrf.mxu0
        %v468 = vpop.f32.mrf.mxu0
        %v469 = vadd.f32 0.0, %v468
        %v470 = vpop.f32.mrf.mxu0
        %471 = vmatprep.mubr.bf16.mxu0 0
        %472 = vmatmul.mubr.bf16.gmra.mxu0 %v410
        %v473 = vpop.f32.mrf.mxu0
        %v474 = vadd.f32 0.0, %v473
        %v475 = vpop.f32.mrf.mxu0
        %v476 = vpop.f32.mrf.mxu0
        %v477 = vadd.f32 0.0, %v476
        %v478 = vpop.f32.mrf.mxu0
        %479 = vmatprep.mubr.bf16.mxu0 0
        %480 = vmatmul.mubr.bf16.gmra.mxu0 %v413
        %v481 = vpop.f32.mrf.mxu0
        %v482 = vadd.f32 0.0, %v481
        %v483 = vpop.f32.mrf.mxu0
        %v484 = vpop.f32.mrf.mxu0
        %v485 = vpop.f32.mrf.mxu0
        %486 = vdwg.mxu0
        %v487 = vadd.f32 %v307, %v450
        %v488 = vadd.f32 %v308, %v453
        %v489 = vadd.f32 %v309, %v458
        %v490 = vadd.f32 %v310, %v461
        %v491 = vadd.f32 %v311, %v466
        %v492 = vadd.f32 %v312, %v469
        %v493 = vadd.f32 %v313, %v474
        %v494 = vadd.f32 %v314, %v477
        %v495 = vadd.f32 %v315, %v482
        %496 = vst [vmem:[#allocation2] sm:$0xff] %v487
        %497 = vst [vmem:[#allocation2 + $0x8] sm:$0xff] %v488
        %498 = vst [vmem:[#allocation2 + $0x10] sm:$0xff] %v489
        %499 = vst [vmem:[#allocation2 + $0x18] sm:$0xff] %v490
        %500 = vst [vmem:[#allocation2 + $0x20] sm:$0xff] %v491
        %501 = vst [vmem:[#allocation2 + $0x28] sm:$0xff] %v492
        %502 = vst [vmem:[#allocation2 + $0x30] sm:$0xff] %v493
        %503 = vst [vmem:[#allocation2 + $0x38] sm:$0xff] %v494
        %504 = vst [vmem:[#allocation2 + $0x40] sm:$0xff] %v495
        %v505 = vld [vmem:[#allocation2] sm:$0xff]
        %v506 = vld [vmem:[#allocation2 + $0x8] sm:$0xff]
        %v507 = vld [vmem:[#allocation2 + $0x10] sm:$0xff]
        %v508 = vld [vmem:[#allocation2 + $0x18] sm:$0xff]
        %v509 = vld [vmem:[#allocation2 + $0x20] sm:$0xff]
        %v510 = vld [vmem:[#allocation2 + $0x28] sm:$0xff]
        %v511 = vld [vmem:[#allocation2 + $0x30] sm:$0xff]
        %v512 = vld [vmem:[#allocation2 + $0x38] sm:$0xff]
        %v513 = vld [vmem:[#allocation2 + $0x40] sm:$0xff]
        %v514 = vld [vmem:[%s168 + $0x4] sm:$0xf]
        %v515 = vld [vmem:[%s168 + $0x8] sm:$0xf]
        %v516 = vld [vmem:[%s168 + $0xc] sm:$0xf]
        %v517 = vld [vmem:[%s168 + $0x10] sm:$0xf]
        %v518 = vld [vmem:[%s168 + $0x14] sm:$0xf]
        %v519 = vld [vmem:[%s168 + $0x18] sm:$0xf]
        %v520 = vld [vmem:[%s168 + $0x1c] sm:$0xf]
        %v521 = vld [vmem:[%s168 + $0x20] sm:$0xf]
        %v522 = vld [vmem:[%s168 + $0x24] sm:$0xf]
        %v523 = vld [vmem:[%s168 + $0x28] sm:$0x1]
        %s524 = scalar_lea.vmem %s1, 16
        %v525 = vld [vmem:[%s524] sm:$0xf]
        %v526 = vld [vmem:[%s524 + $0x4] sm:$0xf]
        %v537 = vunpack.c.l.b16 %v514
        %v538 = vunpack.c.l.b16 %v515
        %v539 = vunpack.c.l.b16 %v516
        %v540 = vunpack.c.l.b16 %v517
        %v541 = vunpack.c.l.b16 %v518
        %v542 = vunpack.c.l.b16 %v519
        %v543 = vunpack.c.l.b16 %v520
        %v544 = vunpack.c.l.b16 %v521
        %v545 = vunpack.c.l.b16 %v522
        %v546 = vunpack.c.l.b16 %v523
        %v547 = vpack.c.b16 %v538, %v537
        %v548 = vpack.c.b16 %v540, %v539
        %v549 = vpack.c.b16 %v542, %v541
        %v550 = vpack.c.b16 %v544, %v543
        %v551 = vpack.c.b16 %v546, %v545
        %v553 = vshrl.u32 %v547, 16
        %v555 = vshll.u32 %v547, 16
        %v557 = vrot.slane %v555, 1
        %v558 = vor.u32 %v553, %v557
        %v560 = vshll.u32 %v548, 16
        %v562 = vrot.slane %v560, 1
        %v563 = vsel %vm354, %v558, %v562
        %v564 = vshrl.u32 %v548, 16
        %v566 = vor.u32 %v564, %v562
        %v568 = vshll.u32 %v549, 16
        %v570 = vrot.slane %v568, 1
        %v571 = vsel %vm354, %v566, %v570
        %v572 = vshrl.u32 %v549, 16
        %v574 = vor.u32 %v572, %v570
        %v576 = vshll.u32 %v550, 16
        %v578 = vrot.slane %v576, 1
        %v579 = vsel %vm354, %v574, %v578
        %v580 = vshrl.u32 %v550, 16
        %v582 = vor.u32 %v580, %v578
        %v584 = vshll.u32 %v551, 16
        %v586 = vrot.slane %v584, 1
        %v587 = vsel %vm354, %v582, %v586
        %v588 = vshrl.u32 %v551, 16
        %v590 = vor.u32 %v588, %v586
        %v593 = vunpack.c.l.b16 %v525
        %v594 = vunpack.c.l.b16 %v526
        %v595 = vpack.c.b16 %v594, %v593
        %v598 = vsel %vm210, %v563, 0
        %v601 = vsel %vm210, %v571, 0
        %v604 = vsel %vm210, %v579, 0
        %v607 = vsel %vm210, %v587, 0
        %v610 = vsel %vm210, %v590, 0
        %612 = vmatprep.subr.bf16.mxu0 0
        %613 = vmatpush1.bf16.msra.mxu0 0
        %614 = vmatprep.subr.bf16.mxu0 0
        %615 = vmatpush1.bf16.msra.mxu0 0
        %616 = vmatprep.subr.bf16.mxu0 0
        %617 = vmatpush1.bf16.msra.mxu0 0
        %618 = vmatprep.subr.bf16.mxu0 0
        %619 = vmatpush1.bf16.msra.mxu0 0
        %620 = vmatprep.subr.bf16.mxu0 0
        %621 = vmatpush1.bf16.msra.mxu0 0
        %622 = vmatprep.subr.bf16.mxu0 0
        %623 = vmatpush1.bf16.msra.mxu0 0
        %624 = vmatprep.subr.bf16.mxu0 0
        %625 = vmatpush1.bf16.msra.mxu0 0
        %626 = vmatprep.subr.bf16.mxu0 0
        %627 = vmatpush1.bf16.msra.mxu0 %v595
        %628 = vmatprep.subr.bf16.mxu0 0
        %629 = vmatpush2.bf16.msra.mxu0 0
        %630 = vmatprep.subr.bf16.mxu0 0
        %631 = vmatpush2.bf16.msra.mxu0 0
        %632 = vmatprep.subr.bf16.mxu0 0
        %633 = vmatpush2.bf16.msra.mxu0 0
        %634 = vmatprep.subr.bf16.mxu0 0
        %635 = vmatpush2.bf16.msra.mxu0 0
        %636 = vmatprep.subr.bf16.mxu0 0
        %637 = vmatpush2.bf16.msra.mxu0 0
        %638 = vmatprep.subr.bf16.mxu0 0
        %639 = vmatpush2.bf16.msra.mxu0 0
        %640 = vmatprep.subr.bf16.mxu0 0
        %641 = vmatpush2.bf16.msra.mxu0 0
        %642 = vmatprep.subr.bf16.mxu0 0
        %643 = vmatpush2.bf16.msra.mxu0 0
        %644 = vmatprep.mubr.bf16.mxu0 0
        %645 = vmatmul.mubr.bf16.gmra.mxu0 %v598
        %v646 = vpop.f32.mrf.mxu0
        %v647 = vadd.f32 0.0, %v646
        %v648 = vpop.f32.mrf.mxu0
        %v649 = vpop.f32.mrf.mxu0
        %v650 = vadd.f32 0.0, %v649
        %v651 = vpop.f32.mrf.mxu0
        %652 = vmatprep.mubr.bf16.mxu0 0
        %653 = vmatmul.mubr.bf16.gmra.mxu0 %v601
        %v654 = vpop.f32.mrf.mxu0
        %v655 = vadd.f32 0.0, %v654
        %v656 = vpop.f32.mrf.mxu0
        %v657 = vpop.f32.mrf.mxu0
        %v658 = vadd.f32 0.0, %v657
        %v659 = vpop.f32.mrf.mxu0
        %660 = vmatprep.mubr.bf16.mxu0 0
        %661 = vmatmul.mubr.bf16.gmra.mxu0 %v604
        %v662 = vpop.f32.mrf.mxu0
        %v663 = vadd.f32 0.0, %v662
        %v664 = vpop.f32.mrf.mxu0
        %v665 = vpop.f32.mrf.mxu0
        %v666 = vadd.f32 0.0, %v665
        %v667 = vpop.f32.mrf.mxu0
        %668 = vmatprep.mubr.bf16.mxu0 0
        %669 = vmatmul.mubr.bf16.gmra.mxu0 %v607
        %v670 = vpop.f32.mrf.mxu0
        %v671 = vadd.f32 0.0, %v670
        %v672 = vpop.f32.mrf.mxu0
        %v673 = vpop.f32.mrf.mxu0
        %v674 = vadd.f32 0.0, %v673
        %v675 = vpop.f32.mrf.mxu0
        %676 = vmatprep.mubr.bf16.mxu0 0
        %677 = vmatmul.mubr.bf16.gmra.mxu0 %v610
        %v678 = vpop.f32.mrf.mxu0
        %v679 = vadd.f32 0.0, %v678
        %v680 = vpop.f32.mrf.mxu0
        %v681 = vpop.f32.mrf.mxu0
        %v682 = vpop.f32.mrf.mxu0
        %683 = vdwg.mxu0
        %v684 = vadd.f32 %v505, %v647
        %v685 = vadd.f32 %v506, %v650
        %v686 = vadd.f32 %v507, %v655
        %v687 = vadd.f32 %v508, %v658
        %v688 = vadd.f32 %v509, %v663
        %v689 = vadd.f32 %v510, %v666
        %v690 = vadd.f32 %v511, %v671
        %v691 = vadd.f32 %v512, %v674
        %v692 = vadd.f32 %v513, %v679
        %693 = vst [vmem:[#allocation2] sm:$0xff] %v684
        %694 = vst [vmem:[#allocation2 + $0x8] sm:$0xff] %v685
        %695 = vst [vmem:[#allocation2 + $0x10] sm:$0xff] %v686
        %696 = vst [vmem:[#allocation2 + $0x18] sm:$0xff] %v687
        %697 = vst [vmem:[#allocation2 + $0x20] sm:$0xff] %v688
        %698 = vst [vmem:[#allocation2 + $0x28] sm:$0xff] %v689
        %699 = vst [vmem:[#allocation2 + $0x30] sm:$0xff] %v690
        %700 = vst [vmem:[#allocation2 + $0x38] sm:$0xff] %v691
        %701 = vst [vmem:[#allocation2 + $0x40] sm:$0xff] %v692
        %v702 = vld [vmem:[#allocation2] sm:$0xff]
        %v703 = vld [vmem:[#allocation2 + $0x8] sm:$0xff]
        %v704 = vld [vmem:[#allocation2 + $0x10] sm:$0xff]
        %v705 = vld [vmem:[#allocation2 + $0x18] sm:$0xff]
        %v706 = vld [vmem:[#allocation2 + $0x20] sm:$0xff]
        %v707 = vld [vmem:[#allocation2 + $0x28] sm:$0xff]
        %v708 = vld [vmem:[#allocation2 + $0x30] sm:$0xff]
        %v709 = vld [vmem:[#allocation2 + $0x38] sm:$0xff]
        %v710 = vld [vmem:[#allocation2 + $0x40] sm:$0xff]
        %v711 = vld [vmem:[%s168 + $0x4] sm:$0xe]
        %v712 = vld [vmem:[%s168 + $0x8] sm:$0xf]
        %v713 = vld [vmem:[%s168 + $0xc] sm:$0xf]
        %v714 = vld [vmem:[%s168 + $0x10] sm:$0xf]
        %v715 = vld [vmem:[%s168 + $0x14] sm:$0xf]
        %v716 = vld [vmem:[%s168 + $0x18] sm:$0xf]
        %v717 = vld [vmem:[%s168 + $0x1c] sm:$0xf]
        %v718 = vld [vmem:[%s168 + $0x20] sm:$0xf]
        %v719 = vld [vmem:[%s168 + $0x24] sm:$0xf]
        %v720 = vld [vmem:[%s168 + $0x28] sm:$0x1]
        %s721 = scalar_lea.vmem %s1, 24
        %v722 = vld [vmem:[%s721] sm:$0xf]
        %v723 = vld [vmem:[%s721 + $0x4] sm:$0xf]
        %v734 = vunpack.c.l.b16 %v711
        %v735 = vunpack.c.l.b16 %v712
        %v736 = vunpack.c.l.b16 %v713
        %v737 = vunpack.c.l.b16 %v714
        %v738 = vunpack.c.l.b16 %v715
        %v739 = vunpack.c.l.b16 %v716
        %v740 = vunpack.c.l.b16 %v717
        %v741 = vunpack.c.l.b16 %v718
        %v742 = vunpack.c.l.b16 %v719
        %v743 = vunpack.c.l.b16 %v720
        %v744 = vpack.c.b16 %v735, %v734
        %v745 = vpack.c.b16 %v737, %v736
        %v746 = vpack.c.b16 %v739, %v738
        %v747 = vpack.c.b16 %v741, %v740
        %v748 = vpack.c.b16 %v743, %v742
        %vm749 = vcmask 1046528
        %v750 = vrot.slane %v744, 1
        %v751 = vrot.slane %v745, 1
        %v752 = vsel %vm749, %v750, %v751
        %v753 = vrot.slane %v746, 1
        %v754 = vsel %vm749, %v751, %v753
        %v755 = vrot.slane %v747, 1
        %v756 = vsel %vm749, %v753, %v755
        %v757 = vrot.slane %v748, 1
        %v758 = vsel %vm749, %v755, %v757
        %v761 = vunpack.c.l.b16 %v722
        %v762 = vunpack.c.l.b16 %v723
        %v763 = vpack.c.b16 %v762, %v761
        %v766 = vsel %vm210, %v752, 0
        %v769 = vsel %vm210, %v754, 0
        %v772 = vsel %vm210, %v756, 0
        %v775 = vsel %vm210, %v758, 0
        %v778 = vsel %vm210, %v757, 0
        %780 = vmatprep.subr.bf16.mxu0 0
        %781 = vmatpush1.bf16.msra.mxu0 0
        %782 = vmatprep.subr.bf16.mxu0 0
        %783 = vmatpush1.bf16.msra.mxu0 0
        %784 = vmatprep.subr.bf16.mxu0 0
        %785 = vmatpush1.bf16.msra.mxu0 0
        %786 = vmatprep.subr.bf16.mxu0 0
        %787 = vmatpush1.bf16.msra.mxu0 0
        %788 = vmatprep.subr.bf16.mxu0 0
        %789 = vmatpush1.bf16.msra.mxu0 0
        %790 = vmatprep.subr.bf16.mxu0 0
        %791 = vmatpush1.bf16.msra.mxu0 0
        %792 = vmatprep.subr.bf16.mxu0 0
        %793 = vmatpush1.bf16.msra.mxu0 0
        %794 = vmatprep.subr.bf16.mxu0 0
        %795 = vmatpush1.bf16.msra.mxu0 %v763
        %796 = vmatprep.subr.bf16.mxu0 0
        %797 = vmatpush2.bf16.msra.mxu0 0
        %798 = vmatprep.subr.bf16.mxu0 0
        %799 = vmatpush2.bf16.msra.mxu0 0
        %800 = vmatprep.subr.bf16.mxu0 0
        %801 = vmatpush2.bf16.msra.mxu0 0
        %802 = vmatprep.subr.bf16.mxu0 0
        %803 = vmatpush2.bf16.msra.mxu0 0
        %804 = vmatprep.subr.bf16.mxu0 0
        %805 = vmatpush2.bf16.msra.mxu0 0
        %806 = vmatprep.subr.bf16.mxu0 0
        %807 = vmatpush2.bf16.msra.mxu0 0
        %808 = vmatprep.subr.bf16.mxu0 0
        %809 = vmatpush2.bf16.msra.mxu0 0
        %810 = vmatprep.subr.bf16.mxu0 0
        %811 = vmatpush2.bf16.msra.mxu0 0
        %812 = vmatprep.mubr.bf16.mxu0 0
        %813 = vmatmul.mubr.bf16.gmra.mxu0 %v766
        %v814 = vpop.f32.mrf.mxu0
        %v815 = vadd.f32 0.0, %v814
        %v816 = vpop.f32.mrf.mxu0
        %v817 = vpop.f32.mrf.mxu0
        %v818 = vadd.f32 0.0, %v817
        %v819 = vpop.f32.mrf.mxu0
        %820 = vmatprep.mubr.bf16.mxu0 0
        %821 = vmatmul.mubr.bf16.gmra.mxu0 %v769
        %v822 = vpop.f32.mrf.mxu0
        %v823 = vadd.f32 0.0, %v822
        %v824 = vpop.f32.mrf.mxu0
        %v825 = vpop.f32.mrf.mxu0
        %v826 = vadd.f32 0.0, %v825
        %v827 = vpop.f32.mrf.mxu0
        %828 = vmatprep.mubr.bf16.mxu0 0
        %829 = vmatmul.mubr.bf16.gmra.mxu0 %v772
        %v830 = vpop.f32.mrf.mxu0
        %v831 = vadd.f32 0.0, %v830
        %v832 = vpop.f32.mrf.mxu0
        %v833 = vpop.f32.mrf.mxu0
        %v834 = vadd.f32 0.0, %v833
        %v835 = vpop.f32.mrf.mxu0
        %836 = vmatprep.mubr.bf16.mxu0 0
        %837 = vmatmul.mubr.bf16.gmra.mxu0 %v775
        %v838 = vpop.f32.mrf.mxu0
        %v839 = vadd.f32 0.0, %v838
        %v840 = vpop.f32.mrf.mxu0
        %v841 = vpop.f32.mrf.mxu0
        %v842 = vadd.f32 0.0, %v841
        %v843 = vpop.f32.mrf.mxu0
        %844 = vmatprep.mubr.bf16.mxu0 0
        %845 = vmatmul.mubr.bf16.gmra.mxu0 %v778
        %v846 = vpop.f32.mrf.mxu0
        %v847 = vadd.f32 0.0, %v846
        %v848 = vpop.f32.mrf.mxu0
        %v849 = vpop.f32.mrf.mxu0
        %v850 = vpop.f32.mrf.mxu0
        %851 = vdwg.mxu0
        %v852 = vadd.f32 %v702, %v815
        %v853 = vadd.f32 %v703, %v818
        %v854 = vadd.f32 %v704, %v823
        %v855 = vadd.f32 %v705, %v826
        %v856 = vadd.f32 %v706, %v831
        %v857 = vadd.f32 %v707, %v834
        %v858 = vadd.f32 %v708, %v839
        %v859 = vadd.f32 %v709, %v842
        %v860 = vadd.f32 %v710, %v847
        %861 = vst [vmem:[#allocation2] sm:$0xff] %v852
        %862 = vst [vmem:[#allocation2 + $0x8] sm:$0xff] %v853
        %863 = vst [vmem:[#allocation2 + $0x10] sm:$0xff] %v854
        %864 = vst [vmem:[#allocation2 + $0x18] sm:$0xff] %v855
        %865 = vst [vmem:[#allocation2 + $0x20] sm:$0xff] %v856
        %866 = vst [vmem:[#allocation2 + $0x28] sm:$0xff] %v857
        %867 = vst [vmem:[#allocation2 + $0x30] sm:$0xff] %v858
        %868 = vst [vmem:[#allocation2 + $0x38] sm:$0xff] %v859
        %869 = vst [vmem:[#allocation2 + $0x40] sm:$0xff] %v860
        %v870 = vld [vmem:[#allocation2] sm:$0xff]
        %v871 = vld [vmem:[#allocation2 + $0x8] sm:$0xff]
        %v872 = vld [vmem:[#allocation2 + $0x10] sm:$0xff]
        %v873 = vld [vmem:[#allocation2 + $0x18] sm:$0xff]
        %v874 = vld [vmem:[#allocation2 + $0x20] sm:$0xff]
        %v875 = vld [vmem:[#allocation2 + $0x28] sm:$0xff]
        %v876 = vld [vmem:[#allocation2 + $0x30] sm:$0xff]
        %v877 = vld [vmem:[#allocation2 + $0x38] sm:$0xff]
        %v878 = vld [vmem:[#allocation2 + $0x40] sm:$0xff]
        %v879 = vld [vmem:[%s2] sm:$0x1]
        %v881 = vlaneseq
        %v882 = vshrl.u32 %v881, 7
        %v883 = vsub.s32 0, %v882
        %v884 = vrot.slane %v879, %v883
        %v886 = vadd.f32 %v870, %v884
        %v887 = vadd.f32 %v871, %v884
        %v888 = vadd.f32 %v872, %v884
        %v889 = vadd.f32 %v873, %v884
        %v890 = vadd.f32 %v874, %v884
        %v891 = vadd.f32 %v875, %v884
        %v892 = vadd.f32 %v876, %v884
        %v893 = vadd.f32 %v877, %v884
        %v894 = vadd.f32 %v878, %v884
        %v895 = vpack.c.bf16 %v887, %v886
        %v896 = vpack.c.bf16 %v889, %v888
        %v897 = vpack.c.bf16 %v891, %v890
        %v898 = vpack.c.bf16 %v893, %v892
        %v899 = vpack.c.bf16 %v894, %v894
        %v905 = vunpack.c.l.b16 %v895
        %v906 = vunpack.c.h.b16 %v895
        %v907 = vunpack.c.l.b16 %v896
        %v908 = vunpack.c.h.b16 %v896
        %v909 = vunpack.c.l.b16 %v897
        %v910 = vunpack.c.h.b16 %v897
        %v911 = vunpack.c.l.b16 %v898
        %v912 = vunpack.c.h.b16 %v898
        %v913 = vunpack.c.l.b16 %v899
        %v914 = vpack.c.b16 %v905, %v905
        %v915 = vpack.c.b16 %v906, %v906
        %v916 = vpack.c.b16 %v907, %v907
        %v917 = vpack.c.b16 %v908, %v908
        %v918 = vpack.c.b16 %v909, %v909
        %v919 = vpack.c.b16 %v910, %v910
        %v920 = vpack.c.b16 %v911, %v911
        %v921 = vpack.c.b16 %v912, %v912
        %v922 = vpack.c.b16 %v913, %v913
        %932 = vst [vmem:[%s163] sm:$0xf] %v914
        %933 = vst [vmem:[%s163 + $0x4] sm:$0xf] %v915
        %934 = vst [vmem:[%s163 + $0x8] sm:$0xf] %v916
        %935 = vst [vmem:[%s163 + $0xc] sm:$0xf] %v917
        %936 = vst [vmem:[%s163 + $0x10] sm:$0xf] %v918
        %937 = vst [vmem:[%s163 + $0x14] sm:$0xf] %v919
        %938 = vst [vmem:[%s163 + $0x18] sm:$0xf] %v920
        %939 = vst [vmem:[%s163 + $0x1c] sm:$0xf] %v921
        %940 = vst [vmem:[%s163 + $0x20] sm:$0xf] %v922
        %s941 = sand.u32 %s93, 1
        %s942 = scalar_lea.sflag [#allocation4], %s941
        %s943 = sand.u32 %s93, 1
        %s944 = smul.addr %s943, 36
        %s945 = scalar_lea.vmem [#allocation3], %s944
        // Predicated region
        $region33: #{tpu_custom_call.1} parent=31 // pred_check
          %p946 = pneg %p103
        $region34: #{tpu_custom_call.1} parent=31 // pred_check_branch
          %948 = sbr.rel (%p946) target = $region36
        $region35: #{tpu_custom_call.1} parent=31 // pred_region
          %s950 = ssub.s32 576, 576
          %951 = vsyncadd %s942, %s950
          %s952 = smul.addr %s17, 9
          %s953 = smul.addr %s952, 64
          %s954 = scalar_lea.hbm %s3, %s953
          %s955 = sshll.u32 %s945, 4
          %s956 = int_to_ptr.vmem [resolvable:$true] %s955
          %961 = dma.vmem_to_hbm [thread:$0]  %s956, 576, %s954, %s942, 64, 64, 4
        $region36: #{tpu_custom_call.1} parent=31 // pred_fallthru
          _
      $region32: #{tpu_custom_call.1} parent=5 // pred_fallthru
        _
      %p962 = scmp.le.s32.totalorder 2, %s12
      // Predicated region
      $region37: #{tpu_custom_call.1} parent=5 // pred_check
        %p963 = pneg %p962
      $region38: #{tpu_custom_call.1} parent=5 // pred_check_branch
        %965 = sbr.rel (%p963) target = $region40
      $region39: #{tpu_custom_call.1} parent=5 // pred_region
        %s966 = ssub.s32 %s12, 2
        // Predicated region
        $region41: #{tpu_custom_call.1} parent=39 // pred_check
          %p967 = pneg %p109
        $region42: #{tpu_custom_call.1} parent=39 // pred_check_branch
          %969 = sbr.rel (%p967) target = $region44
        $region43: #{tpu_custom_call.1} parent=39 // pred_region
          %s970 = sand.u32 %s94, 1
          %s971 = scalar_lea.sflag [#allocation4], %s970
          %s972 = sand.u32 %s94, 1
          %s973 = smul.addr %s972, 36
          %s974 = scalar_lea.vmem [#allocation3], %s973
          %975 = dma.done %s971, 576
        $region44: #{tpu_custom_call.1} parent=39 // pred_fallthru
          _
      $region40: #{tpu_custom_call.1} parent=5 // pred_fallthru
        _
    $region6: #{tpu_custom_call.1} parent=1 // loop_footer
      %s16 = sadd.s32 1, %s12
    $region7: #{tpu_custom_call.1} parent=1 // loop_footer_branch
      %11 = sbr.rel target = $region3
    $region8: #{tpu_custom_call.1} parent=1 // loop_exit
      _
    %976 = vsyncpa [#allocation4], 1
    %s977 = scalar_lea.sflag [#allocation4], 1
    %978 = vsyncpa %s977, 1

</llo_original>
